<compile_context>
chip_gen: v7x
topology: tpu7x:2x2x1
jax: 0.10.0
libtpu: 0.0.40
codegen_flags: <defaults>
</compile_context>

<pallas_src>
import functools

import jax
import jax.numpy as jnp
from jax.experimental import pallas as pl
from jax.experimental.pallas import tpu as pltpu


def _kvmn_kernel(key_ref, val_ref, hid_ref, mask_ref, o_ref, *, inv_scale):
    # hid_ref: (bt, lt, E); key_ref: (bt, S, E); val/mask/o: (bt, lt, S)
    hid = hid_ref[...].astype(jnp.float32)
    key = key_ref[...].astype(jnp.float32)
    # Batched matmul contracting on the shared last (E) dim -> the MXU consumes
    # both operands directly, no per-step transpose.
    u = jnp.einsum("ble,bse->bls", hid, key,
                   preferred_element_type=jnp.float32) * inv_scale
    # NOTE: no max-subtraction, to match torch.exp(u) in the reference module.
    exp_u = jnp.exp(u)
    delta = exp_u * mask_ref[...].astype(jnp.float32)
    denom = jnp.sum(delta, axis=-1, keepdims=True) + 1e-10
    # EUP approx reciprocal + one Newton-Raphson refinement (~f32 accuracy,
    # cheaper than a full-precision VALU divide chain).
    r = pl.reciprocal(denom, approx=True)
    r = r * (2.0 - denom * r)
    p = delta * r
    o_ref[...] = (p * val_ref[...].astype(jnp.float32)).astype(o_ref.dtype)


def _pick_tiles(B, L, S, E, itemsize=4, vmem_budget=24 * 1024 * 1024):
    """Biggest (bt, lt) whose double-buffered VMEM footprint fits the budget."""
    def footprint(bt, lt):
        # key + hidden + value + mask + out, each double-buffered.
        return 2 * itemsize * (bt * S * E + bt * lt * E + 3 * bt * lt * S)

    bt, lt = B, L
    while footprint(bt, lt) > vmem_budget:
        # Shrink the L tile first (key block is reused across L tiles), keeping
        # lt a multiple of 8 (sublane alignment) and a divisor of L; then bt.
        if lt % 2 == 0 and (lt // 2) % 8 == 0 and L % (lt // 2) == 0:
            lt //= 2
        elif bt % 2 == 0:
            bt //= 2
        else:
            break  # cannot shrink cleanly; run with the largest feasible tiles
    return bt, lt


def kvmn_forward(key_embed, value_embed, hidden, mask_matrix, emb_size):
    B, L, E = hidden.shape
    S = key_embed.shape[1]
    inv_scale = 1.0 / (float(emb_size) ** 0.5)

    bt, lt = _pick_tiles(B, L, S, E)
    grid = (B // bt, L // lt)

    kernel = functools.partial(_kvmn_kernel, inv_scale=inv_scale)

    return pl.pallas_call(
        kernel,
        out_shape=jax.ShapeDtypeStruct((B, L, S), jnp.float32),
        grid_spec=pltpu.PrefetchScalarGridSpec(
            num_scalar_prefetch=0,
            grid=grid,
            in_specs=[
                # key block is L-tile invariant (same block across the l axis).
                pl.BlockSpec((bt, S, E), lambda b, l: (b, 0, 0)),    # key_embed
                pl.BlockSpec((bt, lt, S), lambda b, l: (b, l, 0)),   # value_embed
                pl.BlockSpec((bt, lt, E), lambda b, l: (b, l, 0)),   # hidden
                pl.BlockSpec((bt, lt, S), lambda b, l: (b, l, 0)),   # mask_matrix
            ],
            out_specs=pl.BlockSpec((bt, lt, S), lambda b, l: (b, l, 0)),
        ),
        compiler_params=pltpu.CompilerParams(
            # Both grid axes are fully independent -> shardable across the
            # v7x dual TensorCores; harmless on single-TC v5e/v6e.
            dimension_semantics=("parallel", "parallel")),
    )(key_embed, value_embed, hidden, mask_matrix)


def _reference(key_embed, value_embed, hidden, mask_matrix, emb_size):
    scale = float(emb_size) ** 0.5
    u = jnp.einsum("ble,bse->bls", hidden, key_embed) / scale
    exp_u = jnp.exp(u)
    d = exp_u * mask_matrix
    s = jnp.sum(d, axis=2, keepdims=True)
    p = d / (s + 1e-10)
    return p * value_embed


if __name__ == "__main__":
    # Small shapes consistent with the module's forward.
    B, L, S, E = 2, 8, 8, 32
    vocab_size, feature_vocab_size = 16, 10

    key = jax.random.PRNGKey(0)
    k1, k2, k3, k4, k5 = jax.random.split(key, 5)

    # Deterministic "parameters": key embedding table (vocab_size, emb_size),
    # padding_idx=0 -> row 0 is zero (as nn.Embedding(padding_idx=0)).
    key_table = jax.random.normal(k1, (vocab_size, E), dtype=jnp.float32)
    key_table = key_table.at[0].set(0.0)
    # value embedding table exists in __init__ but its lookup happens outside
    # this forward; value_embed is passed in pre-broadcastable with p=(B,L,S).
    value_table = jax.random.normal(k2, (feature_vocab_size, E), dtype=jnp.float32)
    value_table = value_table.at[0].set(0.0)
    del value_table  # TODO(synk): value_embedding lookup is never used inside forward()

    key_ids = jax.random.randint(k3, (B, S), 0, vocab_size)
    key_embed = key_table[key_ids]                                     # (B, S, E)
    value_embed = jax.random.normal(k4, (B, L, S), dtype=jnp.float32)  # (B, L, S)
    hidden = jax.random.normal(k5, (B, L, E), dtype=jnp.float32)       # (B, L, E)
    mask_matrix = (jax.random.uniform(jax.random.PRNGKey(42), (B, L, S)) > 0.3
                   ).astype(jnp.float32)                               # (B, L, S)

    out = kvmn_forward(key_embed, value_embed, hidden, mask_matrix, E)
    out = jax.block_until_ready(out)

    ref = _reference(key_embed, value_embed, hidden, mask_matrix, E)
    assert out.shape == (B, L, S)
    assert jnp.allclose(out, ref, atol=1e-5, rtol=1e-5), "mismatch vs reference"

    print("KERNEL_OK")
</pallas_src>

<mosaic_0001>
module attributes {stable_mosaic.version = 11 : i64} {
  func.func @_kvmn_kernel(%arg0: i32, %arg1: i32, %arg2: memref<2x8x32xf32, #tpu.memory_space<vmem>>, %arg3: memref<2x8x8xf32, #tpu.memory_space<vmem>>, %arg4: memref<2x8x32xf32, #tpu.memory_space<vmem>>, %arg5: memref<2x8x8xf32, #tpu.memory_space<vmem>>, %arg6: memref<2x8x8xf32, #tpu.memory_space<vmem>>) attributes {dimension_semantics = [#tpu.dimension_semantics<parallel>, #tpu.dimension_semantics<parallel>], iteration_bounds = array<i64: 1, 1>, scalar_prefetch = 0 : i64, scratch_operands = 0 : i64, tpu.core_type = #tpu.core_type<tc>, window_params = [{transform_indices = @transform_0, window_bounds = array<i64: 2, 8, 32>}, {transform_indices = @transform_1, window_bounds = array<i64: 2, 8, 8>}, {transform_indices = @transform_2, window_bounds = array<i64: 2, 8, 32>}, {transform_indices = @transform_3, window_bounds = array<i64: 2, 8, 8>}, {transform_indices = @transform_4, window_bounds = array<i64: 2, 8, 8>}]} {
    %c0 = arith.constant 0 : index
    %c0_0 = arith.constant 0 : index
    %c0_1 = arith.constant 0 : index
    %0 = vector.load %arg4[%c0, %c0_0, %c0_1] : memref<2x8x32xf32, #tpu.memory_space<vmem>>, vector<2x8x32xf32>
    %c0_2 = arith.constant 0 : index
    %c0_3 = arith.constant 0 : index
    %c0_4 = arith.constant 0 : index
    %1 = vector.load %arg2[%c0_2, %c0_3, %c0_4] : memref<2x8x32xf32, #tpu.memory_space<vmem>>, vector<2x8x32xf32>
    "tpu.trace_start"() <{level = 10 : i32, message = "ble,bse->bls"}> : () -> ()
    %cst = arith.constant dense<0.000000e+00> : vector<2x8x8xf32>
    %2 = tpu.matmul %0, %1, %cst {dimension_numbers = #tpu.dot_dimension_numbers<[2], [2], [1], [1], [0, 0, 0, 1, 1, 1], [0], [0]>} : vector<2x8x32xf32>, vector<2x8x32xf32>, vector<2x8x8xf32> -> vector<2x8x8xf32>
    "tpu.trace_stop"() : () -> ()
    %cst_5 = arith.constant 0.176776692 : f32
    %3 = vector.broadcast %cst_5 : f32 to vector<2x8x8xf32>
    %4 = arith.mulf %2, %3 : vector<2x8x8xf32>
    %5 = math.exp %4 : vector<2x8x8xf32>
    %c0_6 = arith.constant 0 : index
    %c0_7 = arith.constant 0 : index
    %c0_8 = arith.constant 0 : index
    %6 = vector.load %arg5[%c0_6, %c0_7, %c0_8] : memref<2x8x8xf32, #tpu.memory_space<vmem>>, vector<2x8x8xf32>
    %7 = arith.mulf %5, %6 : vector<2x8x8xf32>
    %cst_9 = arith.constant dense<0.000000e+00> : vector<2x8xf32>
    %8 = vector.multi_reduction <add>, %7, %cst_9 [2] : vector<2x8x8xf32> to vector<2x8xf32>
    %9 = vector.shape_cast %8 : vector<2x8xf32> to vector<2x8x1xf32>
    %cst_10 = arith.constant 1.000000e-10 : f32
    %10 = vector.broadcast %cst_10 : f32 to vector<2x8x1xf32>
    %11 = arith.addf %9, %10 : vector<2x8x1xf32>
    %12 = tpu.reciprocal %11 {approx = true} : vector<2x8x1xf32> -> vector<2x8x1xf32>
    %13 = arith.mulf %11, %12 : vector<2x8x1xf32>
    %cst_11 = arith.constant 2.000000e+00 : f32
    %14 = vector.broadcast %cst_11 : f32 to vector<2x8x1xf32>
    %15 = arith.subf %14, %13 : vector<2x8x1xf32>
    %16 = arith.mulf %12, %15 : vector<2x8x1xf32>
    %17 = vector.broadcast %16 : vector<2x8x1xf32> to vector<2x8x8xf32>
    %18 = arith.mulf %7, %17 : vector<2x8x8xf32>
    %c0_12 = arith.constant 0 : index
    %c0_13 = arith.constant 0 : index
    %c0_14 = arith.constant 0 : index
    %19 = vector.load %arg3[%c0_12, %c0_13, %c0_14] : memref<2x8x8xf32, #tpu.memory_space<vmem>>, vector<2x8x8xf32>
    %20 = arith.mulf %18, %19 : vector<2x8x8xf32>
    %c0_15 = arith.constant 0 : index
    %c0_16 = arith.constant 0 : index
    %c0_17 = arith.constant 0 : index
    %21 = vector.load %arg6[%c0_15, %c0_16, %c0_17] : memref<2x8x8xf32, #tpu.memory_space<vmem>>, vector<2x8x8xf32>
    tpu.vector_store %arg6[%c0_15, %c0_16, %c0_17], %20 {strides = array<i32>} : memref<2x8x8xf32, #tpu.memory_space<vmem>>, vector<2x8x8xf32>,
    return
  }
  func.func @transform_0(%arg0: i32, %arg1: i32) -> (i32, i32, i32) {
    %c0_i32 = arith.constant 0 : i32
    %c0_i32_0 = arith.constant 0 : i32
    %c0_i32_1 = arith.constant 0 : i32
    return %arg0, %c0_i32, %c0_i32_0 : i32, i32, i32
  }
  func.func @transform_1(%arg0: i32, %arg1: i32) -> (i32, i32, i32) {
    %c0_i32 = arith.constant 0 : i32
    %c0_i32_0 = arith.constant 0 : i32
    return %arg0, %arg1, %c0_i32 : i32, i32, i32
  }
  func.func @transform_2(%arg0: i32, %arg1: i32) -> (i32, i32, i32) {
    %c0_i32 = arith.constant 0 : i32
    %c0_i32_0 = arith.constant 0 : i32
    return %arg0, %arg1, %c0_i32 : i32, i32, i32
  }
  func.func @transform_3(%arg0: i32, %arg1: i32) -> (i32, i32, i32) {
    %c0_i32 = arith.constant 0 : i32
    %c0_i32_0 = arith.constant 0 : i32
    return %arg0, %arg1, %c0_i32 : i32, i32, i32
  }
  func.func @transform_4(%arg0: i32, %arg1: i32) -> (i32, i32, i32) {
    %c0_i32 = arith.constant 0 : i32
    %c0_i32_0 = arith.constant 0 : i32
    return %arg0, %arg1, %c0_i32 : i32, i32, i32
  }
}

</mosaic_0001>

<llo_original>
// kernel: tpu_custom_call.1
$region0: #{tpu_custom_call.1}
  #allocation0 [shape = 'u32[]', space=smem, size = 0x4, offset = 0x4, fixed_abs, tag = 'smem constant byte address 0x4 - core index']
  #allocation1 [shape = 'u32[144,128]{1,0:T(1,128)}', space=vmem, size = 0x12000, scoped, tag = 'internal scratch']
  %s0 = inlined_call_operand.hbm [shape: f32[2,8,32], index: 0, kind: input, shape index: {}]
  %s1 = inlined_call_operand.hbm [shape: f32[2,8,8], index: 1, kind: input, shape index: {}]
  %s2 = inlined_call_operand.hbm [shape: f32[2,8,32], index: 2, kind: input, shape index: {}]
  %s3 = inlined_call_operand.hbm [shape: f32[2,8,8], index: 3, kind: input, shape index: {}]
  %s4 = inlined_call_operand.hbm [shape: f32[2,8,8], index: 4, kind: output, shape index: {}]
  %s5 = sld [smem:[#allocation0]]
  $region42: #{tpu_custom_call.1} parent=0
    _
  %s7 = ssub.s32 1, %s5
  %s8 = scalar_select 0, %s7, %s5
  $region1: #{tpu_custom_call.1} parent=0
    #allocation2 [shape = 'u8[8192]{0}', space=vmem, size = 0x2000, scoped, tag = 'input window, operand 0, single buffered']
    #allocation3 [shape = 's32[1]{0}', space=sflag, size = 0x4, scoped, tag = 'scoped memory for tpu_custom_call.1']
    #allocation4 [shape = 's32[1]{0}', space=sflag, size = 0x4, scoped, tag = 'scoped memory for tpu_custom_call.1']
    #allocation5 [shape = 'u8[8192]{0}', space=vmem, size = 0x2000, scoped, tag = 'input window, operand 1, single buffered']
    #allocation6 [shape = 's32[1]{0}', space=sflag, size = 0x4, scoped, tag = 'scoped memory for tpu_custom_call.1']
    #allocation7 [shape = 'u8[8192]{0}', space=vmem, size = 0x2000, scoped, tag = 'input window, operand 2, single buffered']
    #allocation8 [shape = 'u8[8192]{0}', space=vmem, size = 0x2000, scoped, tag = 'input window, operand 3, single buffered']
    #allocation9 [shape = 's32[1]{0}', space=sflag, size = 0x4, scoped, tag = 'scoped memory for tpu_custom_call.1']
    #allocation10 [shape = 'u8[8192]{0}', space=vmem, size = 0x2000, scoped, tag = 'output window, operand 0, single buffered']
    %9 = vsyncpa [#allocation3], 0
    %10 = vsyncpa [#allocation6], 0
    %11 = vsyncpa [#allocation9], 0
    %12 = vsyncpa [#allocation4], 0
    // Predicated region
    $region2: #{tpu_custom_call.1} parent=1 // pred_check
      _
    $region3: #{tpu_custom_call.1} parent=1 // pred_check_branch
      %14 = sbr.rel (0) target = $region5
    $region4: #{tpu_custom_call.1} parent=1 // pred_region
      %s16 = ssub.s32 256, 256
      %17 = vsyncadd [#allocation3], %s16
      %s18 = sshll.u32 [#allocation2], 4
      %s19 = int_to_ptr.vmem [resolvable:$true] %s18
      %24 = dma.hbm_to_vmem [thread:$0]  %s0, 256, %s19, [#allocation3], 128, 128, 8
    $region5: #{tpu_custom_call.1} parent=1 // pred_fallthru
      _
    // Predicated region
    $region6: #{tpu_custom_call.1} parent=1 // pred_check
      _
    $region7: #{tpu_custom_call.1} parent=1 // pred_check_branch
      %26 = sbr.rel (0) target = $region9
    $region8: #{tpu_custom_call.1} parent=1 // pred_region
      %s28 = ssub.s32 256, 256
      %29 = vsyncadd [#allocation6], %s28
      %s30 = sshll.u32 [#allocation5], 4
      %s31 = int_to_ptr.vmem [resolvable:$true] %s30
      %36 = dma.hbm_to_vmem [thread:$0]  %s1, 256, %s31, [#allocation6], 128, 128, 8
    $region9: #{tpu_custom_call.1} parent=1 // pred_fallthru
      _
    // Predicated region
    $region10: #{tpu_custom_call.1} parent=1 // pred_check
      _
    $region11: #{tpu_custom_call.1} parent=1 // pred_check_branch
      %38 = sbr.rel (0) target = $region13
    $region12: #{tpu_custom_call.1} parent=1 // pred_region
      %s40 = ssub.s32 256, 256
      %41 = vsyncadd [#allocation6], %s40
      %s42 = sshll.u32 [#allocation7], 4
      %s43 = int_to_ptr.vmem [resolvable:$true] %s42
      %48 = dma.hbm_to_vmem [thread:$0]  %s2, 256, %s43, [#allocation6], 128, 128, 8
    $region13: #{tpu_custom_call.1} parent=1 // pred_fallthru
      _
    // Predicated region
    $region14: #{tpu_custom_call.1} parent=1 // pred_check
      _
    $region15: #{tpu_custom_call.1} parent=1 // pred_check_branch
      %50 = sbr.rel (0) target = $region17
    $region16: #{tpu_custom_call.1} parent=1 // pred_region
      %s52 = ssub.s32 256, 256
      %53 = vsyncadd [#allocation9], %s52
      %s54 = sshll.u32 [#allocation8], 4
      %s55 = int_to_ptr.vmem [resolvable:$true] %s54
      %60 = dma.hbm_to_vmem [thread:$0]  %s3, 256, %s55, [#allocation9], 128, 128, 8
    $region17: #{tpu_custom_call.1} parent=1 // pred_fallthru
      _
    // Predicated region
    $region18: #{tpu_custom_call.1} parent=1 // pred_check
      _
    $region19: #{tpu_custom_call.1} parent=1 // pred_check_branch
      %62 = sbr.rel (0) target = $region21
    $region20: #{tpu_custom_call.1} parent=1 // pred_region
      %63 = dma.done [#allocation3], 256
    $region21: #{tpu_custom_call.1} parent=1 // pred_fallthru
      _
    // Predicated region
    $region22: #{tpu_custom_call.1} parent=1 // pred_check
      _
    $region23: #{tpu_custom_call.1} parent=1 // pred_check_branch
      %65 = sbr.rel (0) target = $region25
    $region24: #{tpu_custom_call.1} parent=1 // pred_region
      %66 = dma.done [#allocation6], 256
    $region25: #{tpu_custom_call.1} parent=1 // pred_fallthru
      _
    // Predicated region
    $region26: #{tpu_custom_call.1} parent=1 // pred_check
      _
    $region27: #{tpu_custom_call.1} parent=1 // pred_check_branch
      %68 = sbr.rel (0) target = $region29
    $region28: #{tpu_custom_call.1} parent=1 // pred_region
      %69 = dma.done [#allocation6], 256
    $region29: #{tpu_custom_call.1} parent=1 // pred_fallthru
      _
    // Predicated region
    $region30: #{tpu_custom_call.1} parent=1 // pred_check
      _
    $region31: #{tpu_custom_call.1} parent=1 // pred_check_branch
      %71 = sbr.rel (0) target = $region33
    $region32: #{tpu_custom_call.1} parent=1 // pred_region
      %72 = dma.done [#allocation9], 256
    $region33: #{tpu_custom_call.1} parent=1 // pred_fallthru
      _
    %v73 = vld [vmem:[#allocation7] sm:$0xff]
    %v74 = vld [vmem:[#allocation7 + $0x8] sm:$0xff]
    %v75 = vld [vmem:[#allocation2] sm:$0xff]
    %v76 = vld [vmem:[#allocation2 + $0x8] sm:$0xff]
    %vm77 = vcmask 261120
    %v79 = vsel %vm77, %v73, 0
    %v82 = vsel %vm77, %v75, 0
    %84 = vmatprep.subr.mxu0 0.0
    %85 = vmatpush1.xpose.msra.mxu0 %v82
    %86 = vmatprep.subr.mxu0 0.0
    %87 = vmatpush1.xpose.msra.mxu0 0.0
    %88 = vmatprep.subr.mxu0 0.0
    %89 = vmatpush1.xpose.msra.mxu0 0.0
    %90 = vmatprep.subr.mxu0 0.0
    %91 = vmatpush1.xpose.msra.mxu0 0.0
    %92 = vmatprep.subr.mxu0 0.0
    %93 = vmatpush1.xpose.msra.mxu0 0.0
    %94 = vmatprep.subr.mxu0 0.0
    %95 = vmatpush1.xpose.msra.mxu0 0.0
    %96 = vmatprep.subr.mxu0 0.0
    %97 = vmatpush1.xpose.msra.mxu0 0.0
    %98 = vmatprep.subr.mxu0 0.0
    %99 = vmatpush1.xpose.msra.mxu0 0.0
    %100 = vmatprep.subr.mxu0 0.0
    %101 = vmatpush1.xpose.msra.mxu0 0.0
    %102 = vmatprep.subr.mxu0 0.0
    %103 = vmatpush1.xpose.msra.mxu0 0.0
    %104 = vmatprep.subr.mxu0 0.0
    %105 = vmatpush1.xpose.msra.mxu0 0.0
    %106 = vmatprep.subr.mxu0 0.0
    %107 = vmatpush1.xpose.msra.mxu0 0.0
    %108 = vmatprep.subr.mxu0 0.0
    %109 = vmatpush1.xpose.msra.mxu0 0.0
    %110 = vmatprep.subr.mxu0 0.0
    %111 = vmatpush1.xpose.msra.mxu0 0.0
    %112 = vmatprep.subr.mxu0 0.0
    %113 = vmatpush1.xpose.msra.mxu0 0.0
    %114 = vmatprep.subr.mxu0 0.0
    %115 = vmatpush1.xpose.msra.mxu0 0.0
    %116 = vmatprep.subr.mxu0 0.0
    %117 = vmatpush1.xpose.msra.mxu0 0.0
    %118 = vmatprep.subr.mxu0 0.0
    %119 = vmatpush1.xpose.msra.mxu0 0.0
    %120 = vmatprep.subr.mxu0 0.0
    %121 = vmatpush1.xpose.msra.mxu0 0.0
    %122 = vmatprep.subr.mxu0 0.0
    %123 = vmatpush1.xpose.msra.mxu0 0.0
    %124 = vmatprep.subr.mxu0 0.0
    %125 = vmatpush1.xpose.msra.mxu0 0.0
    %126 = vmatprep.subr.mxu0 0.0
    %127 = vmatpush1.xpose.msra.mxu0 0.0
    %128 = vmatprep.subr.mxu0 0.0
    %129 = vmatpush1.xpose.msra.mxu0 0.0
    %130 = vmatprep.subr.mxu0 0.0
    %131 = vmatpush1.xpose.msra.mxu0 0.0
    %132 = vmatprep.subr.mxu0 0.0
    %133 = vmatpush1.xpose.msra.mxu0 0.0
    %134 = vmatprep.subr.mxu0 0.0
    %135 = vmatpush1.xpose.msra.mxu0 0.0
    %136 = vmatprep.subr.mxu0 0.0
    %137 = vmatpush1.xpose.msra.mxu0 0.0
    %138 = vmatprep.subr.mxu0 0.0
    %139 = vmatpush1.xpose.msra.mxu0 0.0
    %140 = vmatprep.subr.mxu0 0.0
    %141 = vmatpush1.xpose.msra.mxu0 0.0
    %142 = vmatprep.subr.mxu0 0.0
    %143 = vmatpush1.xpose.msra.mxu0 0.0
    %144 = vmatprep.subr.mxu0 0.0
    %145 = vmatpush1.xpose.msra.mxu0 0.0
    %146 = vmatprep.subr.mxu0 0.0
    %147 = vmatpush1.xpose.msra.mxu0 0.0
    %148 = vmatprep.mubr.f32.mxu0 0.0
    %149 = vmatmul.mubr.f32.gmra.mrb[0].mxu0 %v79
    %v150 = vpop.f32.mrb[0].mxu0
    %v151 = vadd.f32 0.0, %v150
    %v152 = vpop.f32.mrb[0].mxu0
    %153 = vdwg.mxu0
    %v155 = vsel %vm77, %v74, 0
    %v158 = vsel %vm77, %v76, 0
    %160 = vmatprep.subr.mxu0 0.0
    %161 = vmatpush1.xpose.msra.mxu0 %v158
    %162 = vmatprep.subr.mxu0 0.0
    %163 = vmatpush1.xpose.msra.mxu0 0.0
    %164 = vmatprep.subr.mxu0 0.0
    %165 = vmatpush1.xpose.msra.mxu0 0.0
    %166 = vmatprep.subr.mxu0 0.0
    %167 = vmatpush1.xpose.msra.mxu0 0.0
    %168 = vmatprep.subr.mxu0 0.0
    %169 = vmatpush1.xpose.msra.mxu0 0.0
    %170 = vmatprep.subr.mxu0 0.0
    %171 = vmatpush1.xpose.msra.mxu0 0.0
    %172 = vmatprep.subr.mxu0 0.0
    %173 = vmatpush1.xpose.msra.mxu0 0.0
    %174 = vmatprep.subr.mxu0 0.0
    %175 = vmatpush1.xpose.msra.mxu0 0.0
    %176 = vmatprep.subr.mxu0 0.0
    %177 = vmatpush1.xpose.msra.mxu0 0.0
    %178 = vmatprep.subr.mxu0 0.0
    %179 = vmatpush1.xpose.msra.mxu0 0.0
    %180 = vmatprep.subr.mxu0 0.0
    %181 = vmatpush1.xpose.msra.mxu0 0.0
    %182 = vmatprep.subr.mxu0 0.0
    %183 = vmatpush1.xpose.msra.mxu0 0.0
    %184 = vmatprep.subr.mxu0 0.0
    %185 = vmatpush1.xpose.msra.mxu0 0.0
    %186 = vmatprep.subr.mxu0 0.0
    %187 = vmatpush1.xpose.msra.mxu0 0.0
    %188 = vmatprep.subr.mxu0 0.0
    %189 = vmatpush1.xpose.msra.mxu0 0.0
    %190 = vmatprep.subr.mxu0 0.0
    %191 = vmatpush1.xpose.msra.mxu0 0.0
    %192 = vmatprep.subr.mxu0 0.0
    %193 = vmatpush1.xpose.msra.mxu0 0.0
    %194 = vmatprep.subr.mxu0 0.0
    %195 = vmatpush1.xpose.msra.mxu0 0.0
    %196 = vmatprep.subr.mxu0 0.0
    %197 = vmatpush1.xpose.msra.mxu0 0.0
    %198 = vmatprep.subr.mxu0 0.0
    %199 = vmatpush1.xpose.msra.mxu0 0.0
    %200 = vmatprep.subr.mxu0 0.0
    %201 = vmatpush1.xpose.msra.mxu0 0.0
    %202 = vmatprep.subr.mxu0 0.0
    %203 = vmatpush1.xpose.msra.mxu0 0.0
    %204 = vmatprep.subr.mxu0 0.0
    %205 = vmatpush1.xpose.msra.mxu0 0.0
    %206 = vmatprep.subr.mxu0 0.0
    %207 = vmatpush1.xpose.msra.mxu0 0.0
    %208 = vmatprep.subr.mxu0 0.0
    %209 = vmatpush1.xpose.msra.mxu0 0.0
    %210 = vmatprep.subr.mxu0 0.0
    %211 = vmatpush1.xpose.msra.mxu0 0.0
    %212 = vmatprep.subr.mxu0 0.0
    %213 = vmatpush1.xpose.msra.mxu0 0.0
    %214 = vmatprep.subr.mxu0 0.0
    %215 = vmatpush1.xpose.msra.mxu0 0.0
    %216 = vmatprep.subr.mxu0 0.0
    %217 = vmatpush1.xpose.msra.mxu0 0.0
    %218 = vmatprep.subr.mxu0 0.0
    %219 = vmatpush1.xpose.msra.mxu0 0.0
    %220 = vmatprep.subr.mxu0 0.0
    %221 = vmatpush1.xpose.msra.mxu0 0.0
    %222 = vmatprep.subr.mxu0 0.0
    %223 = vmatpush1.xpose.msra.mxu0 0.0
    %224 = vmatprep.mubr.f32.mxu0 0.0
    %225 = vmatmul.mubr.f32.gmra.mrb[0].mxu0 %v155
    %v226 = vpop.f32.mrb[0].mxu0
    %v227 = vadd.f32 0.0, %v226
    %v228 = vpop.f32.mrb[0].mxu0
    %229 = vdwg.mxu0
    %v230 = vmul.f32 %v151, 0.17677669
    %v231 = vmul.f32 %v227, 0.17677669
    %v232 = vmul.f32 %v230, 1.442695
    %v233 = vpow.pop %v232
    %v234 = vmul.f32 %v231, 1.442695
    %v235 = vpow.pop %v234
    %v236 = vld [vmem:[#allocation8] sm:$0xff]
    %v237 = vld [vmem:[#allocation8 + $0x8] sm:$0xff]
    %v238 = vmul.f32 %v233, %v236
    %v239 = vmul.f32 %v235, %v237
    %vm240 = vcmask 64512
    %v241 = vsel %vm240, %v238, 0.0
    %242 = vadd.xlane.f32.xlu0 %v241
    %v243 = vpop.xlane.xlu0 %242
    %v244 = vsel %vm240, %v239, 0.0
    %245 = vadd.xlane.f32.xlu0 %v244
    %v246 = vpop.xlane.xlu0 %245
    %v247 = vadd.f32 %v243, 1e-10
    %v248 = vadd.f32 %v246, 1e-10
    %v249 = vrcp.pop %v247
    %v250 = vrcp.pop %v248
    %v251 = vmul.f32 %v247, %v249
    %v252 = vmul.f32 %v248, %v250
    %v253 = vsub.f32 2.0, %v251
    %v254 = vsub.f32 2.0, %v252
    %v255 = vmul.f32 %v249, %v253
    %v256 = vmul.f32 %v250, %v254
    %v257 = vmul.f32 %v238, %v255
    %v258 = vmul.f32 %v239, %v256
    %v259 = vld [vmem:[#allocation5] sm:$0xff]
    %v260 = vld [vmem:[#allocation5 + $0x8] sm:$0xff]
    %v261 = vmul.f32 %v257, %v259
    %v262 = vmul.f32 %v258, %v260
    %263 = vst.msk [vmem:[#allocation10] sm:$0xff] %vm240, %v261
    %264 = vst.msk [vmem:[#allocation10 + $0x8] sm:$0xff] %vm240, %v262
    // Predicated region
    $region34: #{tpu_custom_call.1} parent=1 // pred_check
      _
    $region35: #{tpu_custom_call.1} parent=1 // pred_check_branch
      %266 = sbr.rel (0) target = $region37
    $region36: #{tpu_custom_call.1} parent=1 // pred_region
      %s268 = ssub.s32 256, 256
      %269 = vsyncadd [#allocation4], %s268
      %s270 = sshll.u32 [#allocation10], 4
      %s271 = int_to_ptr.vmem [resolvable:$true] %s270
      %276 = dma.vmem_to_hbm [thread:$0]  %s271, 256, %s4, [#allocation4], 128, 128, 8
    $region37: #{tpu_custom_call.1} parent=1 // pred_fallthru
      _
    // Predicated region
    $region38: #{tpu_custom_call.1} parent=1 // pred_check
      _
    $region39: #{tpu_custom_call.1} parent=1 // pred_check_branch
      %278 = sbr.rel (0) target = $region41
    $region40: #{tpu_custom_call.1} parent=1 // pred_region
      %279 = dma.done [#allocation4], 256
    $region41: #{tpu_custom_call.1} parent=1 // pred_fallthru
      _
    %280 = vsyncpa [#allocation3], 1
    %281 = vsyncpa [#allocation6], 1
    %282 = vsyncpa [#allocation9], 1
    %283 = vsyncpa [#allocation4], 1

</llo_original>
